<compile_context>
chip_gen: v7x
topology: tpu7x:2x2x1
jax: 0.10.0
libtpu: 0.0.40
codegen_flags: <defaults>
</compile_context>

<pallas_src>
import functools

import jax
import jax.numpy as jnp
from jax.experimental import pallas as pl
from jax.experimental.pallas import tpu as pltpu


def _dcn_kernel(x_ref, supT_ref, wblk_ref, b_ref, o_ref, *,
                supports_len, order):
    """One (batch, l-tile) block of the DCN forward pass.

    x_ref    : (N, F_in)          F_in  = tl * C   (l-major, c-minor), bf16
    supT_ref : (S, N, N)          pre-transposed adjacencies A^T, bf16
    wblk_ref : (K, F_in, F_out)   K = order*S + 1, F_out = tl * c_out,
                                  block-diagonal kron(I_tl, W_k^T), bf16
    b_ref    : (1, F_out)         bias tiled over the l-tile, f32
    o_ref    : (N, F_out)
    """
    cdt = x_ref.dtype
    x0 = x_ref[...]                                           # (N, F_in)

    # Term 0 (identity diffusion): acc = x0 @ Wblk[0]   (f32 accumulator).
    acc = jnp.dot(x0, wblk_ref[0], preferred_element_type=jnp.float32)

    # Diffusion chains.  Interleave the S independent chains (all order-1
    # A^T @ x matmuls, then order-2, ...) so dependent pushes do not serialize
    # on the MXU result FIFO (v5e / v6e); only S intermediates stay live.
    chains = [None] * supports_len
    for o in range(1, order + 1):
        for s in range(supports_len):
            prev = x0 if o == 1 else chains[s].astype(cdt)
            chains[s] = jnp.dot(supT_ref[s], prev,
                                preferred_element_type=jnp.float32)
            k = 1 + s * order + (o - 1)      # matches torch.cat channel order
            acc = acc + jnp.dot(chains[s].astype(cdt), wblk_ref[k],
                                preferred_element_type=jnp.float32)

    # TODO(synk): dropout is identity here (eval mode); training-mode dropout
    # would use pltpu.prng_seed + pltpu.stateful_bernoulli.
    o_ref[...] = (acc + b_ref[...]).astype(o_ref.dtype)


def _choose_l_tile(L, C, c_out, K, bytes_per_el, wblk_budget=4 << 20):
    """Largest l-tile that keeps lane-aligned blocks and a small weight slab."""
    for tl in range(L, 0, -1):
        if L % tl != 0:
            continue
        lane_ok = (tl == L) or ((tl * C) % 128 == 0 and (tl * c_out) % 128 == 0)
        if lane_ok and K * tl * C * tl * c_out * bytes_per_el <= wblk_budget:
            return tl
    return L


def dcn_forward(x, supports, w, b, *, order=2, compute_dtype=jnp.bfloat16):
    """x: (B, N, L, C); supports: (S, N, N); w: (c_out, C_total) torch-style;
    b: (c_out,).  Returns (B, N, L, c_out) in x.dtype."""
    B, N, L, C = x.shape
    S = supports.shape[0]
    c_out, c_total = w.shape
    K = order * S + 1
    assert c_total == K * C

    tl = _choose_l_tile(L, C, c_out, K, jnp.dtype(compute_dtype).itemsize)
    n_lt = L // tl
    f_in, f_out = tl * C, tl * c_out

    # ---- wrapper-side layout plumbing (free / one-time XLA work) -----------
    # Merge (L, C) into the lane axis; the kernel tiles it in steps of tl*C.
    x_flat = x.reshape(B, N, L * C).astype(compute_dtype)
    # Pre-transpose adjacencies so the kernel never does A.T.
    sup_t = jnp.transpose(supports, (0, 2, 1)).astype(compute_dtype)
    # Per-term column block of the mlp weight, expanded to a block-diagonal
    # kron(I_tl, W_k^T): "concat + linear" becomes a sum of lane-dense matmuls.
    eye_tl = jnp.eye(tl, dtype=w.dtype)
    w_blocks = jnp.stack(
        [jnp.kron(eye_tl, w[:, k * C:(k + 1) * C].T) for k in range(K)],
        axis=0).astype(compute_dtype)                       # (K, f_in, f_out)
    b_tiled = jnp.tile(b.astype(jnp.float32), tl).reshape(1, f_out)

    kernel = functools.partial(_dcn_kernel, supports_len=S, order=order)

    out_flat = pl.pallas_call(
        kernel,
        out_shape=jax.ShapeDtypeStruct((B, N, L * c_out), x.dtype),
        grid_spec=pltpu.PrefetchScalarGridSpec(
            num_scalar_prefetch=0,
            grid=(B, n_lt),
            in_specs=[
                pl.BlockSpec((None, N, f_in), lambda bi, li: (bi, 0, li)),
                pl.BlockSpec((S, N, N), lambda bi, li: (0, 0, 0)),
                pl.BlockSpec((K, f_in, f_out), lambda bi, li: (0, 0, 0)),
                pl.BlockSpec((1, f_out), lambda bi, li: (0, 0)),
            ],
            out_specs=pl.BlockSpec((None, N, f_out), lambda bi, li: (bi, 0, li)),
        ),
        compiler_params=pltpu.CompilerParams(
            dimension_semantics=("parallel", "parallel")),
    )(x_flat, sup_t, w_blocks, b_tiled)

    return out_flat.reshape(B, N, L, c_out)


def dcn_reference(x, supports, w, b, *, order=2):
    """Pure-JAX (f32) reference mirroring the PyTorch forward (eval mode)."""
    out = [x]
    for si in range(supports.shape[0]):
        a = supports[si]
        x1 = jnp.einsum('bnlc,nw->bwlc', x, a)
        out.append(x1)
        for _ in range(2, order + 1):
            x2 = jnp.einsum('bnlc,nw->bwlc', x1, a)
            out.append(x2)
            x1 = x2
    h = jnp.concatenate(out, axis=-1)
    return jnp.einsum('bnlc,oc->bnlo', h, w) + b


if __name__ == "__main__":
    # Small shapes consistent with the module.
    B, N, L, C = 2, 16, 8, 4          # batch, nodes, seq len, c_in
    supports_len, order = 3, 2
    c_out = 32
    c_total = (order * supports_len + 1) * C   # 28

    key = jax.random.PRNGKey(0)
    kx, ka, kw, kb = jax.random.split(key, 4)

    x = jax.random.normal(kx, (B, N, L, C), dtype=jnp.float32)
    supports = jax.random.uniform(ka, (supports_len, N, N), dtype=jnp.float32)
    # row-normalize adjacency matrices (typical diffusion-conv preprocessing)
    supports = supports / jnp.sum(supports, axis=-1, keepdims=True)

    # PyTorch Linear convention: weight (c_out, c_in), bias (c_out,)
    w = 0.1 * jax.random.normal(kw, (c_out, c_total), dtype=jnp.float32)
    b = 0.01 * jax.random.normal(kb, (c_out,), dtype=jnp.float32)

    y = dcn_forward(x, supports, w, b, order=order)
    y = jax.block_until_ready(y)

    y_ref = dcn_reference(x, supports, w, b, order=order)
    assert y.shape == (B, N, L, c_out)
    # bf16 MXU operands with f32 accumulation -> loosened tolerance vs f32 ref.
    assert jnp.allclose(y, y_ref, atol=5e-2, rtol=5e-2), \
        f"max abs err = {jnp.max(jnp.abs(y - y_ref))}"

    print("KERNEL_OK")
</pallas_src>

<mosaic_0001>
module attributes {stable_mosaic.version = 11 : i64} {
  func.func @_dcn_kernel(%arg0: i32, %arg1: i32, %arg2: memref<1x16x32xbf16, #tpu.memory_space<vmem>>, %arg3: memref<3x16x16xbf16, #tpu.memory_space<vmem>>, %arg4: memref<7x32x256xbf16, #tpu.memory_space<vmem>>, %arg5: memref<1x256xf32, #tpu.memory_space<vmem>>, %arg6: memref<1x16x256xf32, #tpu.memory_space<vmem>>) attributes {dimension_semantics = [#tpu.dimension_semantics<parallel>, #tpu.dimension_semantics<parallel>], iteration_bounds = array<i64: 2, 1>, scalar_prefetch = 0 : i64, scratch_operands = 0 : i64, tpu.core_type = #tpu.core_type<tc>, window_params = [{transform_indices = @transform_0, window_bounds = array<i64: 1, 16, 32>}, {pipeline_mode = #tpu.pipeline_mode<synchronous>, transform_indices = @transform_1, window_bounds = array<i64: 3, 16, 16>}, {pipeline_mode = #tpu.pipeline_mode<synchronous>, transform_indices = @transform_2, window_bounds = array<i64: 7, 32, 256>}, {pipeline_mode = #tpu.pipeline_mode<synchronous>, transform_indices = @transform_3, window_bounds = array<i64: 1, 256>}, {transform_indices = @transform_4, window_bounds = array<i64: 1, 16, 256>}]} {
    %c0 = arith.constant 0 : index
    %c0_0 = arith.constant 0 : index
    %c0_1 = arith.constant 0 : index
    %0 = vector.load %arg2[%c0, %c0_0, %c0_1] : memref<1x16x32xbf16, #tpu.memory_space<vmem>>, vector<1x16x32xbf16>
    %1 = vector.shape_cast %0 : vector<1x16x32xbf16> to vector<16x32xbf16>
    %c0_2 = arith.constant 0 : index
    %c0_3 = arith.constant 0 : index
    %c0_4 = arith.constant 0 : index
    %2 = vector.load %arg4[%c0_2, %c0_3, %c0_4] : memref<7x32x256xbf16, #tpu.memory_space<vmem>>, vector<1x32x256xbf16>
    %3 = vector.shape_cast %2 : vector<1x32x256xbf16> to vector<32x256xbf16>
    %cst = arith.constant dense<0.000000e+00> : vector<16x256xf32>
    %4 = tpu.matmul %1, %3, %cst {dimension_numbers = #tpu.dot_dimension_numbers<[1], [0], [0], [1], [0, 0, 1, 1], [], []>} : vector<16x32xbf16>, vector<32x256xbf16>, vector<16x256xf32> -> vector<16x256xf32>
    %c0_5 = arith.constant 0 : index
    %c0_6 = arith.constant 0 : index
    %c0_7 = arith.constant 0 : index
    %5 = vector.load %arg3[%c0_5, %c0_6, %c0_7] : memref<3x16x16xbf16, #tpu.memory_space<vmem>>, vector<1x16x16xbf16>
    %6 = vector.shape_cast %5 : vector<1x16x16xbf16> to vector<16x16xbf16>
    %cst_8 = arith.constant dense<0.000000e+00> : vector<16x32xf32>
    %7 = tpu.matmul %6, %1, %cst_8 {dimension_numbers = #tpu.dot_dimension_numbers<[1], [0], [0], [1], [0, 0, 1, 1], [], []>} : vector<16x16xbf16>, vector<16x32xbf16>, vector<16x32xf32> -> vector<16x32xf32>
    %8 = arith.truncf %7 : vector<16x32xf32> to vector<16x32xbf16>
    %c1 = arith.constant 1 : index
    %c0_9 = arith.constant 0 : index
    %c0_10 = arith.constant 0 : index
    %9 = vector.load %arg4[%c1, %c0_9, %c0_10] : memref<7x32x256xbf16, #tpu.memory_space<vmem>>, vector<1x32x256xbf16>
    %10 = vector.shape_cast %9 : vector<1x32x256xbf16> to vector<32x256xbf16>
    %cst_11 = arith.constant dense<0.000000e+00> : vector<16x256xf32>
    %11 = tpu.matmul %8, %10, %cst_11 {dimension_numbers = #tpu.dot_dimension_numbers<[1], [0], [0], [1], [0, 0, 1, 1], [], []>} : vector<16x32xbf16>, vector<32x256xbf16>, vector<16x256xf32> -> vector<16x256xf32>
    %12 = arith.addf %4, %11 : vector<16x256xf32>
    %c1_12 = arith.constant 1 : index
    %c0_13 = arith.constant 0 : index
    %c0_14 = arith.constant 0 : index
    %13 = vector.load %arg3[%c1_12, %c0_13, %c0_14] : memref<3x16x16xbf16, #tpu.memory_space<vmem>>, vector<1x16x16xbf16>
    %14 = vector.shape_cast %13 : vector<1x16x16xbf16> to vector<16x16xbf16>
    %cst_15 = arith.constant dense<0.000000e+00> : vector<16x32xf32>
    %15 = tpu.matmul %14, %1, %cst_15 {dimension_numbers = #tpu.dot_dimension_numbers<[1], [0], [0], [1], [0, 0, 1, 1], [], []>} : vector<16x16xbf16>, vector<16x32xbf16>, vector<16x32xf32> -> vector<16x32xf32>
    %16 = arith.truncf %15 : vector<16x32xf32> to vector<16x32xbf16>
    %c3 = arith.constant 3 : index
    %c0_16 = arith.constant 0 : index
    %c0_17 = arith.constant 0 : index
    %17 = vector.load %arg4[%c3, %c0_16, %c0_17] : memref<7x32x256xbf16, #tpu.memory_space<vmem>>, vector<1x32x256xbf16>
    %18 = vector.shape_cast %17 : vector<1x32x256xbf16> to vector<32x256xbf16>
    %cst_18 = arith.constant dense<0.000000e+00> : vector<16x256xf32>
    %19 = tpu.matmul %16, %18, %cst_18 {dimension_numbers = #tpu.dot_dimension_numbers<[1], [0], [0], [1], [0, 0, 1, 1], [], []>} : vector<16x32xbf16>, vector<32x256xbf16>, vector<16x256xf32> -> vector<16x256xf32>
    %20 = arith.addf %12, %19 : vector<16x256xf32>
    %c2 = arith.constant 2 : index
    %c0_19 = arith.constant 0 : index
    %c0_20 = arith.constant 0 : index
    %21 = vector.load %arg3[%c2, %c0_19, %c0_20] : memref<3x16x16xbf16, #tpu.memory_space<vmem>>, vector<1x16x16xbf16>
    %22 = vector.shape_cast %21 : vector<1x16x16xbf16> to vector<16x16xbf16>
    %cst_21 = arith.constant dense<0.000000e+00> : vector<16x32xf32>
    %23 = tpu.matmul %22, %1, %cst_21 {dimension_numbers = #tpu.dot_dimension_numbers<[1], [0], [0], [1], [0, 0, 1, 1], [], []>} : vector<16x16xbf16>, vector<16x32xbf16>, vector<16x32xf32> -> vector<16x32xf32>
    %24 = arith.truncf %23 : vector<16x32xf32> to vector<16x32xbf16>
    %c5 = arith.constant 5 : index
    %c0_22 = arith.constant 0 : index
    %c0_23 = arith.constant 0 : index
    %25 = vector.load %arg4[%c5, %c0_22, %c0_23] : memref<7x32x256xbf16, #tpu.memory_space<vmem>>, vector<1x32x256xbf16>
    %26 = vector.shape_cast %25 : vector<1x32x256xbf16> to vector<32x256xbf16>
    %cst_24 = arith.constant dense<0.000000e+00> : vector<16x256xf32>
    %27 = tpu.matmul %24, %26, %cst_24 {dimension_numbers = #tpu.dot_dimension_numbers<[1], [0], [0], [1], [0, 0, 1, 1], [], []>} : vector<16x32xbf16>, vector<32x256xbf16>, vector<16x256xf32> -> vector<16x256xf32>
    %28 = arith.addf %20, %27 : vector<16x256xf32>
    %29 = arith.truncf %7 : vector<16x32xf32> to vector<16x32xbf16>
    %c0_25 = arith.constant 0 : index
    %c0_26 = arith.constant 0 : index
    %c0_27 = arith.constant 0 : index
    %30 = vector.load %arg3[%c0_25, %c0_26, %c0_27] : memref<3x16x16xbf16, #tpu.memory_space<vmem>>, vector<1x16x16xbf16>
    %31 = vector.shape_cast %30 : vector<1x16x16xbf16> to vector<16x16xbf16>
    %cst_28 = arith.constant dense<0.000000e+00> : vector<16x32xf32>
    %32 = tpu.matmul %31, %29, %cst_28 {dimension_numbers = #tpu.dot_dimension_numbers<[1], [0], [0], [1], [0, 0, 1, 1], [], []>} : vector<16x16xbf16>, vector<16x32xbf16>, vector<16x32xf32> -> vector<16x32xf32>
    %33 = arith.truncf %32 : vector<16x32xf32> to vector<16x32xbf16>
    %c2_29 = arith.constant 2 : index
    %c0_30 = arith.constant 0 : index
    %c0_31 = arith.constant 0 : index
    %34 = vector.load %arg4[%c2_29, %c0_30, %c0_31] : memref<7x32x256xbf16, #tpu.memory_space<vmem>>, vector<1x32x256xbf16>
    %35 = vector.shape_cast %34 : vector<1x32x256xbf16> to vector<32x256xbf16>
    %cst_32 = arith.constant dense<0.000000e+00> : vector<16x256xf32>
    %36 = tpu.matmul %33, %35, %cst_32 {dimension_numbers = #tpu.dot_dimension_numbers<[1], [0], [0], [1], [0, 0, 1, 1], [], []>} : vector<16x32xbf16>, vector<32x256xbf16>, vector<16x256xf32> -> vector<16x256xf32>
    %37 = arith.addf %28, %36 : vector<16x256xf32>
    %38 = arith.truncf %15 : vector<16x32xf32> to vector<16x32xbf16>
    %c1_33 = arith.constant 1 : index
    %c0_34 = arith.constant 0 : index
    %c0_35 = arith.constant 0 : index
    %39 = vector.load %arg3[%c1_33, %c0_34, %c0_35] : memref<3x16x16xbf16, #tpu.memory_space<vmem>>, vector<1x16x16xbf16>
    %40 = vector.shape_cast %39 : vector<1x16x16xbf16> to vector<16x16xbf16>
    %cst_36 = arith.constant dense<0.000000e+00> : vector<16x32xf32>
    %41 = tpu.matmul %40, %38, %cst_36 {dimension_numbers = #tpu.dot_dimension_numbers<[1], [0], [0], [1], [0, 0, 1, 1], [], []>} : vector<16x16xbf16>, vector<16x32xbf16>, vector<16x32xf32> -> vector<16x32xf32>
    %42 = arith.truncf %41 : vector<16x32xf32> to vector<16x32xbf16>
    %c4 = arith.constant 4 : index
    %c0_37 = arith.constant 0 : index
    %c0_38 = arith.constant 0 : index
    %43 = vector.load %arg4[%c4, %c0_37, %c0_38] : memref<7x32x256xbf16, #tpu.memory_space<vmem>>, vector<1x32x256xbf16>
    %44 = vector.shape_cast %43 : vector<1x32x256xbf16> to vector<32x256xbf16>
    %cst_39 = arith.constant dense<0.000000e+00> : vector<16x256xf32>
    %45 = tpu.matmul %42, %44, %cst_39 {dimension_numbers = #tpu.dot_dimension_numbers<[1], [0], [0], [1], [0, 0, 1, 1], [], []>} : vector<16x32xbf16>, vector<32x256xbf16>, vector<16x256xf32> -> vector<16x256xf32>
    %46 = arith.addf %37, %45 : vector<16x256xf32>
    %47 = arith.truncf %23 : vector<16x32xf32> to vector<16x32xbf16>
    %c2_40 = arith.constant 2 : index
    %c0_41 = arith.constant 0 : index
    %c0_42 = arith.constant 0 : index
    %48 = vector.load %arg3[%c2_40, %c0_41, %c0_42] : memref<3x16x16xbf16, #tpu.memory_space<vmem>>, vector<1x16x16xbf16>
    %49 = vector.shape_cast %48 : vector<1x16x16xbf16> to vector<16x16xbf16>
    %cst_43 = arith.constant dense<0.000000e+00> : vector<16x32xf32>
    %50 = tpu.matmul %49, %47, %cst_43 {dimension_numbers = #tpu.dot_dimension_numbers<[1], [0], [0], [1], [0, 0, 1, 1], [], []>} : vector<16x16xbf16>, vector<16x32xbf16>, vector<16x32xf32> -> vector<16x32xf32>
    %51 = arith.truncf %50 : vector<16x32xf32> to vector<16x32xbf16>
    %c6 = arith.constant 6 : index
    %c0_44 = arith.constant 0 : index
    %c0_45 = arith.constant 0 : index
    %52 = vector.load %arg4[%c6, %c0_44, %c0_45] : memref<7x32x256xbf16, #tpu.memory_space<vmem>>, vector<1x32x256xbf16>
    %53 = vector.shape_cast %52 : vector<1x32x256xbf16> to vector<32x256xbf16>
    %cst_46 = arith.constant dense<0.000000e+00> : vector<16x256xf32>
    %54 = tpu.matmul %51, %53, %cst_46 {dimension_numbers = #tpu.dot_dimension_numbers<[1], [0], [0], [1], [0, 0, 1, 1], [], []>} : vector<16x32xbf16>, vector<32x256xbf16>, vector<16x256xf32> -> vector<16x256xf32>
    %55 = arith.addf %46, %54 : vector<16x256xf32>
    %c0_47 = arith.constant 0 : index
    %c0_48 = arith.constant 0 : index
    %56 = vector.load %arg5[%c0_47, %c0_48] : memref<1x256xf32, #tpu.memory_space<vmem>>, vector<1x256xf32>
    %57 = vector.broadcast %56 : vector<1x256xf32> to vector<16x256xf32>
    %58 = arith.addf %55, %57 : vector<16x256xf32>
    %c0_49 = arith.constant 0 : index
    %c0_50 = arith.constant 0 : index
    %c0_51 = arith.constant 0 : index
    %59 = vector.load %arg6[%c0_49, %c0_50, %c0_51] : memref<1x16x256xf32, #tpu.memory_space<vmem>>, vector<1x16x256xf32>
    %60 = vector.shape_cast %59 : vector<1x16x256xf32> to vector<16x256xf32>
    %61 = vector.shape_cast %58 : vector<16x256xf32> to vector<1x16x256xf32>
    tpu.vector_store %arg6[%c0_49, %c0_50, %c0_51], %61 {strides = array<i32>} : memref<1x16x256xf32, #tpu.memory_space<vmem>>, vector<1x16x256xf32>,
    return
  }
  func.func @transform_0(%arg0: i32, %arg1: i32) -> (i32, i32, i32) {
    %c0_i32 = arith.constant 0 : i32
    %c0_i32_0 = arith.constant 0 : i32
    return %arg0, %c0_i32, %arg1 : i32, i32, i32
  }
  func.func @transform_1(%arg0: i32, %arg1: i32) -> (i32, i32, i32) {
    %c0_i32 = arith.constant 0 : i32
    %c0_i32_0 = arith.constant 0 : i32
    %c0_i32_1 = arith.constant 0 : i32
    %c0_i32_2 = arith.constant 0 : i32
    return %c0_i32, %c0_i32_0, %c0_i32_1 : i32, i32, i32
  }
  func.func @transform_2(%arg0: i32, %arg1: i32) -> (i32, i32, i32) {
    %c0_i32 = arith.constant 0 : i32
    %c0_i32_0 = arith.constant 0 : i32
    %c0_i32_1 = arith.constant 0 : i32
    %c0_i32_2 = arith.constant 0 : i32
    return %c0_i32, %c0_i32_0, %c0_i32_1 : i32, i32, i32
  }
  func.func @transform_3(%arg0: i32, %arg1: i32) -> (i32, i32) {
    %c0_i32 = arith.constant 0 : i32
    %c0_i32_0 = arith.constant 0 : i32
    %c0_i32_1 = arith.constant 0 : i32
    return %c0_i32, %c0_i32_0 : i32, i32
  }
  func.func @transform_4(%arg0: i32, %arg1: i32) -> (i32, i32, i32) {
    %c0_i32 = arith.constant 0 : i32
    %c0_i32_0 = arith.constant 0 : i32
    return %arg0, %c0_i32, %arg1 : i32, i32, i32
  }
}

</mosaic_0001>

<llo_original>
// kernel: tpu_custom_call.1
$region0: #{tpu_custom_call.1}
  #allocation0 [shape = 'u32[]', space=smem, size = 0x4, offset = 0x4, fixed_abs, tag = 'smem constant byte address 0x4 - core index']
  #allocation1 [shape = 'u32[144,128]{1,0:T(1,128)}', space=vmem, size = 0x12000, scoped, tag = 'internal scratch']
  %s0 = inlined_call_operand.hbm [shape: bf16[2,16,32], index: 0, kind: input, shape index: {}]
  %s1 = inlined_call_operand.hbm [shape: bf16[3,16,16], index: 1, kind: input, shape index: {}]
  %s2 = inlined_call_operand.hbm [shape: bf16[7,32,256], index: 2, kind: input, shape index: {}]
  %s3 = inlined_call_operand.vmem [shape: f32[1,256], index: 3, kind: input, shape index: {}]
  %s4 = inlined_call_operand.hbm [shape: f32[2,16,256], index: 4, kind: output, shape index: {}]
  %s5 = sld [smem:[#allocation0]]
  $region61: #{tpu_custom_call.1} parent=0
    _
  %s7 = ssub.s32 1, %s5
  %s8 = scalar_select 0, %s7, %s5
  $region1: #{tpu_custom_call.1} parent=0
    #allocation2 [shape = 'u8[8192]{0}', space=vmem, size = 0x2000, scoped, tag = 'input window, operand 0']
    #allocation3 [shape = 's32[2]{0}', space=sflag, size = 0x8, scoped, tag = 'scoped memory for tpu_custom_call.1']
    #allocation4 [shape = 's32[2]{0}', space=sflag, size = 0x8, scoped, tag = 'scoped memory for tpu_custom_call.1']
    #allocation5 [shape = 'u8[12288]{0}', space=vmem, size = 0x3000, scoped, tag = 'input window, operand 1, single buffered']
    #allocation6 [shape = 's32[1]{0}', space=sflag, size = 0x4, scoped, tag = 'scoped memory for tpu_custom_call.1']
    #allocation7 [shape = 'u8[114688]{0}', space=vmem, size = 0x1c000, scoped, tag = 'input window, operand 2, single buffered']
    #allocation8 [shape = 'u8[32768]{0}', space=vmem, size = 0x8000, scoped, tag = 'output window, operand 0']
    %9 = vsyncpa [#allocation3], 0
    %s10 = scalar_lea.sflag [#allocation3], 1
    %11 = vsyncpa %s10, 0
    %12 = vsyncpa [#allocation6], 0
    %13 = vsyncpa [#allocation4], 0
    %s14 = scalar_lea.sflag [#allocation4], 1
    %15 = vsyncpa %s14, 0
    loop: start=0, step=1, limit=4
    $region2: #{tpu_custom_call.1} parent=1 // loop_pre_header
      _
    $region3: #{tpu_custom_call.1} parent=1 // loop_header
      %s17 = sphi 0, %s21
      %p18 = scmp.ge.s32.totalorder %s17, 4
      %s24 = sphi 0, %s36
      %s25 = sphi 0, %s32
      %s26 = sphi 0, %s24
      %s27 = sphi 0, %s25
      %s28 = sphi 0, %s26
      %s29 = sphi 0, %s27
      %s41 = sphi 0, %s43
      %s44 = sphi 0, %s41
      %s45 = sphi 0, %s44
      %s61 = sphi 0, %s45
      %s65 = sphi 0, %s65
      %s67 = sphi 0, %s65
      %s68 = sphi 0, %s67
      %s82 = sphi 0, %s68
      %s86 = sphi 0, %s86
      %s88 = sphi 0, %s86
      %s89 = sphi 0, %s88
      %s103 = sphi 0, %s89
      %s107 = sphi 0, %s107
      %s109 = sphi 0, %s107
      %s110 = sphi 0, %s109
      %s124 = sphi 0, %s110
      %s132 = sphi 0, %s134
      %s135 = sphi 0, %s132
      %s136 = sphi 0, %s135
      %s152 = sphi 0, %s136
    $region4: #{tpu_custom_call.1} parent=1 // loop_header_branch
      %20 = sbr.rel (%p18) target = $region8
    $region5: #{tpu_custom_call.1} parent=1 // loop_body
      %s22 = ssub.s32 %s17, 1
      %s23 = ssub.s32 %s17, 2
      %s30 = sadd.s32 1, %s25
      %p31 = scmp.ge.s32.totalorder %s30, 1
      %s32 = scalar_select %p31, 0, %s30
      %s33 = sadd.s32 1, %s24
      %s34 = scalar_select %p31, %s33, %s24
      %p35 = scmp.ge.s32.totalorder %s34, 2
      %s36 = scalar_select %p35, 0, %s34
      %s37 = ssub.s32 %s24, %s36
      %s38 = ssub.s32 %s25, %s32
      %s39 = sor.u32 %s37, %s38
      %p40 = scmp.eq.s32.totalorder %s39, 0
      %s42 = sadd.s32 %s41, 1
      %s43 = scalar_select %p40, %s41, %s42
      %p46 = pneg %p40
      %p47 = scmp.eq.s32.totalorder %s17, 1
      %p48 = por %p46, %p47
      %p49 = scmp.ne.s32.totalorder %s41, %s44
      %p50 = scmp.eq.s32.totalorder %s17, 0
      %p51 = por %p49, %p50
      %p52 = scmp.ne.s32.totalorder %s41, %s44
      %p53 = scmp.eq.s32.totalorder %s22, 1
      %p54 = por %p52, %p53
      %p55 = scmp.ne.s32.totalorder %s44, %s45
      %p56 = scmp.eq.s32.totalorder %s22, 0
      %p57 = por %p55, %p56
      %p58 = scmp.ne.s32.totalorder %s44, %s45
      %p59 = scmp.eq.s32.totalorder %s23, 1
      %p60 = por %p58, %p59
      %p62 = scmp.ne.s32.totalorder %s45, %s61
      %p63 = scmp.eq.s32.totalorder %s23, 0
      %p64 = por %p62, %p63
      %s66 = sadd.s32 %s65, 1
      %p69 = scmp.eq.s32.totalorder %s17, 1
      %p70 = scmp.ne.s32.totalorder %s65, %s67
      %p71 = scmp.eq.s32.totalorder %s17, 0
      %p72 = por %p70, %p71
      %p73 = scmp.ne.s32.totalorder %s65, %s67
      %p74 = scmp.eq.s32.totalorder %s22, 1
      %p75 = por %p73, %p74
      %p76 = scmp.ne.s32.totalorder %s67, %s68
      %p77 = scmp.eq.s32.totalorder %s22, 0
      %p78 = por %p76, %p77
      %p79 = scmp.ne.s32.totalorder %s67, %s68
      %p80 = scmp.eq.s32.totalorder %s23, 1
      %p81 = por %p79, %p80
      %p83 = scmp.ne.s32.totalorder %s68, %s82
      %p84 = scmp.eq.s32.totalorder %s23, 0
      %p85 = por %p83, %p84
      %s87 = sadd.s32 %s86, 1
      %p90 = scmp.eq.s32.totalorder %s17, 1
      %p91 = scmp.ne.s32.totalorder %s86, %s88
      %p92 = scmp.eq.s32.totalorder %s17, 0
      %p93 = por %p91, %p92
      %p94 = scmp.ne.s32.totalorder %s86, %s88
      %p95 = scmp.eq.s32.totalorder %s22, 1
      %p96 = por %p94, %p95
      %p97 = scmp.ne.s32.totalorder %s88, %s89
      %p98 = scmp.eq.s32.totalorder %s22, 0
      %p99 = por %p97, %p98
      %p100 = scmp.ne.s32.totalorder %s88, %s89
      %p101 = scmp.eq.s32.totalorder %s23, 1
      %p102 = por %p100, %p101
      %p104 = scmp.ne.s32.totalorder %s89, %s103
      %p105 = scmp.eq.s32.totalorder %s23, 0
      %p106 = por %p104, %p105
      %s108 = sadd.s32 %s107, 1
      %p111 = scmp.eq.s32.totalorder %s17, 1
      %p112 = scmp.ne.s32.totalorder %s107, %s109
      %p113 = scmp.eq.s32.totalorder %s17, 0
      %p114 = por %p112, %p113
      %p115 = scmp.ne.s32.totalorder %s107, %s109
      %p116 = scmp.eq.s32.totalorder %s22, 1
      %p117 = por %p115, %p116
      %p118 = scmp.ne.s32.totalorder %s109, %s110
      %p119 = scmp.eq.s32.totalorder %s22, 0
      %p120 = por %p118, %p119
      %p121 = scmp.ne.s32.totalorder %s109, %s110
      %p122 = scmp.eq.s32.totalorder %s23, 1
      %p123 = por %p121, %p122
      %p125 = scmp.ne.s32.totalorder %s110, %s124
      %p126 = scmp.eq.s32.totalorder %s23, 0
      %p127 = por %p125, %p126
      %s128 = ssub.s32 %s24, %s36
      %s129 = ssub.s32 %s25, %s32
      %s130 = sor.u32 %s128, %s129
      %p131 = scmp.eq.s32.totalorder %s130, 0
      %s133 = sadd.s32 %s132, 1
      %s134 = scalar_select %p131, %s132, %s133
      %p137 = pneg %p131
      %p138 = scmp.eq.s32.totalorder %s17, 1
      %p139 = por %p137, %p138
      %p140 = scmp.ne.s32.totalorder %s132, %s135
      %p141 = scmp.eq.s32.totalorder %s17, 0
      %p142 = por %p140, %p141
      %p143 = scmp.ne.s32.totalorder %s132, %s135
      %p144 = scmp.eq.s32.totalorder %s22, 1
      %p145 = por %p143, %p144
      %p146 = scmp.ne.s32.totalorder %s135, %s136
      %p147 = scmp.eq.s32.totalorder %s22, 0
      %p148 = por %p146, %p147
      %p149 = scmp.ne.s32.totalorder %s135, %s136
      %p150 = scmp.eq.s32.totalorder %s23, 1
      %p151 = por %p149, %p150
      %p153 = scmp.ne.s32.totalorder %s136, %s152
      %p154 = scmp.eq.s32.totalorder %s23, 0
      %p155 = por %p153, %p154
      %p156 = scmp.le.s32.totalorder 1, %s17
      %p157 = scmp.lt.s32.totalorder %s17, 3
      %p158 = pnand %p156, %p157
      %p159 = pneg %p158
      // Predicated region
      $region9: #{tpu_custom_call.1} parent=5 // pred_check
        _
      $region10: #{tpu_custom_call.1} parent=5 // pred_check_branch
        %161 = sbr.rel (%p158) target = $region12
      $region11: #{tpu_custom_call.1} parent=5 // pred_region
        %s162 = ssub.s32 %s17, 1
        // Predicated region
        $region13: #{tpu_custom_call.1} parent=11 // pred_check
          %p163 = pneg %p78
        $region14: #{tpu_custom_call.1} parent=11 // pred_check_branch
          %165 = sbr.rel (%p163) target = $region16
        $region15: #{tpu_custom_call.1} parent=11 // pred_region
          %s167 = ssub.s32 384, 384
          %168 = vsyncadd [#allocation6], %s167
          %s169 = sshll.u32 [#allocation5], 4
          %s170 = int_to_ptr.vmem [resolvable:$true] %s169
          %175 = dma.hbm_to_vmem [thread:$0]  %s1, 384, %s170, [#allocation6], 64, 64, 4
        $region16: #{tpu_custom_call.1} parent=11 // pred_fallthru
          _
        // Predicated region
        $region17: #{tpu_custom_call.1} parent=11 // pred_check
          %p176 = pneg %p99
        $region18: #{tpu_custom_call.1} parent=11 // pred_check_branch
          %178 = sbr.rel (%p176) target = $region20
        $region19: #{tpu_custom_call.1} parent=11 // pred_region
          %s180 = ssub.s32 3584, 3584
          %181 = vsyncadd [#allocation6], %s180
          %s182 = sshll.u32 [#allocation7], 4
          %s183 = int_to_ptr.vmem [resolvable:$true] %s182
          %188 = dma.hbm_to_vmem [thread:$0]  %s2, 3584, %s183, [#allocation6], 128, 128, 8
        $region20: #{tpu_custom_call.1} parent=11 // pred_fallthru
          _
        // Predicated region
        $region21: #{tpu_custom_call.1} parent=11 // pred_check
          %p189 = pneg %p120
        $region22: #{tpu_custom_call.1} parent=11 // pred_check_branch
          %191 = sbr.rel (%p189) target = $region24
        $region23: #{tpu_custom_call.1} parent=11 // pred_region
          _
        $region24: #{tpu_custom_call.1} parent=11 // pred_fallthru
          _
      $region12: #{tpu_custom_call.1} parent=5 // pred_fallthru
        _
      %p192 = scmp.lt.s32.totalorder %s17, 2
      // Predicated region
      $region25: #{tpu_custom_call.1} parent=5 // pred_check
        %p193 = pneg %p192
      $region26: #{tpu_custom_call.1} parent=5 // pred_check_branch
        %195 = sbr.rel (%p193) target = $region28
      $region27: #{tpu_custom_call.1} parent=5 // pred_region
        // Predicated region
        $region29: #{tpu_custom_call.1} parent=27 // pred_check
          %p196 = pneg %p51
        $region30: #{tpu_custom_call.1} parent=27 // pred_check_branch
          %198 = sbr.rel (%p196) target = $region32
        $region31: #{tpu_custom_call.1} parent=27 // pred_region
          %s199 = sand.u32 %s41, 1
          %s200 = scalar_lea.sflag [#allocation3], %s199
          %s201 = sand.u32 %s41, 1
          %s202 = smul.addr %s201, 8
          %s203 = scalar_lea.vmem [#allocation2], %s202
          %s205 = ssub.s32 128, 128
          %206 = vsyncadd %s200, %s205
          %s207 = smul.addr %s24, 2
          %s208 = sadd.s32 %s25, %s207
          %s209 = smul.addr %s208, 64
          %s210 = scalar_lea.hbm %s0, %s209
          %s211 = sshll.u32 %s203, 4
          %s212 = int_to_ptr.vmem [resolvable:$true] %s211
          %217 = dma.hbm_to_vmem [thread:$0]  %s210, 128, %s212, %s200, 64, 64, 4
        $region32: #{tpu_custom_call.1} parent=27 // pred_fallthru
          _
      $region28: #{tpu_custom_call.1} parent=5 // pred_fallthru
        _
      %p218 = scmp.le.s32.totalorder 1, %s17
      %p219 = scmp.lt.s32.totalorder %s17, 3
      %p220 = pnand %p218, %p219
      %p221 = pneg %p220
      // Predicated region
      $region33: #{tpu_custom_call.1} parent=5 // pred_check
        _
      $region34: #{tpu_custom_call.1} parent=5 // pred_check_branch
        %223 = sbr.rel (%p220) target = $region36
      $region35: #{tpu_custom_call.1} parent=5 // pred_region
        %s224 = ssub.s32 %s17, 1
        %s225 = sand.u32 %s44, 1
        %s226 = scalar_lea.sflag [#allocation3], %s225
        %s227 = sand.u32 %s44, 1
        %s228 = smul.addr %s227, 8
        %s229 = scalar_lea.vmem [#allocation2], %s228
        // Predicated region
        $region37: #{tpu_custom_call.1} parent=35 // pred_check
          %p230 = pneg %p57
        $region38: #{tpu_custom_call.1} parent=35 // pred_check_branch
          %232 = sbr.rel (%p230) target = $region40
        $region39: #{tpu_custom_call.1} parent=35 // pred_region
          %233 = dma.done %s226, 128
        $region40: #{tpu_custom_call.1} parent=35 // pred_fallthru
          _
        // Predicated region
        $region41: #{tpu_custom_call.1} parent=35 // pred_check
          %p234 = pneg %p78
        $region42: #{tpu_custom_call.1} parent=35 // pred_check_branch
          %236 = sbr.rel (%p234) target = $region44
        $region43: #{tpu_custom_call.1} parent=35 // pred_region
          %237 = dma.done [#allocation6], 384
        $region44: #{tpu_custom_call.1} parent=35 // pred_fallthru
          _
        // Predicated region
        $region45: #{tpu_custom_call.1} parent=35 // pred_check
          %p238 = pneg %p99
        $region46: #{tpu_custom_call.1} parent=35 // pred_check_branch
          %240 = sbr.rel (%p238) target = $region48
        $region47: #{tpu_custom_call.1} parent=35 // pred_region
          %241 = dma.done [#allocation6], 3584
        $region48: #{tpu_custom_call.1} parent=35 // pred_fallthru
          _
        %s242 = sand.u32 %s44, 1
        %s243 = scalar_lea.sflag [#allocation3], %s242
        %s244 = sand.u32 %s44, 1
        %s245 = smul.addr %s244, 8
        %s246 = scalar_lea.vmem [#allocation2], %s245
        %p247 = pneg %p57
        %p248 = pneg %p54
        %p249 = pneg %p78
        %p250 = pneg %p75
        %p251 = pneg %p99
        %p252 = pneg %p96
        %p253 = pneg %p120
        %p254 = pneg %p117
        %p255 = pneg %p148
        %p256 = pneg %p145
        %s257 = sand.u32 %s135, 1
        %s258 = scalar_lea.sflag [#allocation4], %s257
        %s259 = sand.u32 %s135, 1
        %s260 = smul.addr %s259, 32
        %s261 = scalar_lea.vmem [#allocation8], %s260
        %s262 = smul.u32 2, %s27
        %v264 = vld [vmem:[%s229] sm:$0xf]
        %v265 = vld [vmem:[%s229 + $0x4] sm:$0xf]
        %v266 = vld [vmem:[#allocation7] sm:$0xff]
        %v267 = vld [vmem:[#allocation7 + $0x8] sm:$0xff]
        %v268 = vld [vmem:[#allocation7 + $0x10] sm:$0xff]
        %v269 = vld [vmem:[#allocation7 + $0x18] sm:$0xff]
        %v270 = vld [vmem:[#allocation5] sm:$0xf]
        %v271 = vld [vmem:[#allocation5 + $0x4] sm:$0xf]
        %v274 = vunpack.c.l.b16 %v270
        %v275 = vunpack.c.l.b16 %v271
        %v276 = vpack.c.b16 %v275, %v274
        %v279 = vunpack.c.l.b16 %v264
        %v280 = vunpack.c.l.b16 %v265
        %v281 = vpack.c.b16 %v280, %v279
        %vm283 = vcmask 130048
        %v285 = vsel %vm283, %v276, 0
        %287 = vmatprep.subr.bf16.mxu0 0
        %288 = vmatpush1.bf16.msra.mxu0 %v281
        %289 = vmatprep.subr.bf16.mxu0 0
        %290 = vmatpush1.bf16.msra.mxu0 0
        %291 = vmatprep.subr.bf16.mxu0 0
        %292 = vmatpush1.bf16.msra.mxu0 0
        %293 = vmatprep.subr.bf16.mxu0 0
        %294 = vmatpush1.bf16.msra.mxu0 0
        %295 = vmatprep.subr.bf16.mxu0 0
        %296 = vmatpush1.bf16.msra.mxu0 0
        %297 = vmatprep.subr.bf16.mxu0 0
        %298 = vmatpush1.bf16.msra.mxu0 0
        %299 = vmatprep.subr.bf16.mxu0 0
        %300 = vmatpush1.bf16.msra.mxu0 0
        %301 = vmatprep.subr.bf16.mxu0 0
        %302 = vmatpush1.bf16.msra.mxu0 0
        %303 = vmatprep.subr.bf16.mxu0 0
        %304 = vmatpush1.bf16.msra.mxu0 0
        %305 = vmatprep.subr.bf16.mxu0 0
        %306 = vmatpush1.bf16.msra.mxu0 0
        %307 = vmatprep.subr.bf16.mxu0 0
        %308 = vmatpush1.bf16.msra.mxu0 0
        %309 = vmatprep.subr.bf16.mxu0 0
        %310 = vmatpush1.bf16.msra.mxu0 0
        %311 = vmatprep.subr.bf16.mxu0 0
        %312 = vmatpush1.bf16.msra.mxu0 0
        %313 = vmatprep.subr.bf16.mxu0 0
        %314 = vmatpush1.bf16.msra.mxu0 0
        %315 = vmatprep.subr.bf16.mxu0 0
        %316 = vmatpush1.bf16.msra.mxu0 0
        %317 = vmatprep.subr.bf16.mxu0 0
        %318 = vmatpush1.bf16.msra.mxu0 0
        %319 = vmatprep.mubr.bf16.mxu0 0
        %320 = vmatmul.mubr.bf16.gmra.mrb[0].mxu0 %v285
        %v321 = vpop.f32.mrb[0].mxu0
        %v322 = vadd.f32 0.0, %v321
        %v323 = vpop.f32.mrb[0].mxu0
        %v324 = vpop.f32.mrb[0].mxu0
        %v325 = vadd.f32 0.0, %v324
        %v326 = vpop.f32.mrb[0].mxu0
        %327 = vdwg.mxu0
        %v328 = vpack.c.bf16 %v325, %v322
        %s329 = scalar_lea.vmem [#allocation7], 32
        %v330 = vld [vmem:[%s329] sm:$0xff]
        %v331 = vld [vmem:[%s329 + $0x8] sm:$0xff]
        %v332 = vld [vmem:[%s329 + $0x10] sm:$0xff]
        %v333 = vld [vmem:[%s329 + $0x18] sm:$0xff]
        %v338 = vunpack.c.l.b16 %v330
        %v339 = vunpack.c.h.b16 %v330
        %v340 = vunpack.c.l.b16 %v331
        %v341 = vunpack.c.h.b16 %v331
        %v342 = vunpack.c.l.b16 %v332
        %v343 = vunpack.c.h.b16 %v332
        %v344 = vunpack.c.l.b16 %v333
        %v345 = vunpack.c.h.b16 %v333
        %v346 = vpack.c.b16 %v340, %v338
        %v347 = vpack.c.b16 %v341, %v339
        %v348 = vpack.c.b16 %v344, %v342
        %v349 = vpack.c.b16 %v345, %v343
        %vm354 = vcmask 261120
        %v356 = vsel %vm354, %v328, 0
        %358 = vmatprep.subr.bf16.mxu0 %v347
        %359 = vmatpush1.bf16.msra.mxu0 %v346
        %360 = vmatprep.subr.bf16.mxu0 %v349
        %361 = vmatpush1.bf16.msra.mxu0 %v348
        %362 = vmatprep.subr.bf16.mxu0 0
        %363 = vmatpush1.bf16.msra.mxu0 0
        %364 = vmatprep.subr.bf16.mxu0 0
        %365 = vmatpush1.bf16.msra.mxu0 0
        %366 = vmatprep.subr.bf16.mxu0 0
        %367 = vmatpush1.bf16.msra.mxu0 0
        %368 = vmatprep.subr.bf16.mxu0 0
        %369 = vmatpush1.bf16.msra.mxu0 0
        %370 = vmatprep.subr.bf16.mxu0 0
        %371 = vmatpush1.bf16.msra.mxu0 0
        %372 = vmatprep.subr.bf16.mxu0 0
        %373 = vmatpush1.bf16.msra.mxu0 0
        %374 = vmatprep.subr.bf16.mxu0 0
        %375 = vmatpush1.bf16.msra.mxu0 0
        %376 = vmatprep.subr.bf16.mxu0 0
        %377 = vmatpush1.bf16.msra.mxu0 0
        %378 = vmatprep.subr.bf16.mxu0 0
        %379 = vmatpush1.bf16.msra.mxu0 0
        %380 = vmatprep.subr.bf16.mxu0 0
        %381 = vmatpush1.bf16.msra.mxu0 0
        %382 = vmatprep.subr.bf16.mxu0 0
        %383 = vmatpush1.bf16.msra.mxu0 0
        %384 = vmatprep.subr.bf16.mxu0 0
        %385 = vmatpush1.bf16.msra.mxu0 0
        %386 = vmatprep.subr.bf16.mxu0 0
        %387 = vmatpush1.bf16.msra.mxu0 0
        %388 = vmatprep.subr.bf16.mxu0 0
        %389 = vmatpush1.bf16.msra.mxu0 0
        %390 = vmatprep.mubr.bf16.mxu0 0
        %391 = vmatmul.mubr.bf16.gmra.mrb[0].mxu0 %v356
        %v392 = vpop.f32.mrb[0].mxu0
        %v393 = vadd.f32 0.0, %v392
        %v394 = vpop.f32.mrb[0].mxu0
        %v395 = vadd.f32 0.0, %v394
        %v396 = vpop.f32.mrb[0].mxu0
        %v397 = vadd.f32 0.0, %v396
        %v398 = vpop.f32.mrb[0].mxu0
        %v399 = vadd.f32 0.0, %v398
        %400 = vdwg.mxu0
        %v405 = vunpack.c.l.b16 %v266
        %v406 = vunpack.c.h.b16 %v266
        %v407 = vunpack.c.l.b16 %v267
        %v408 = vunpack.c.h.b16 %v267
        %v409 = vunpack.c.l.b16 %v268
        %v410 = vunpack.c.h.b16 %v268
        %v411 = vunpack.c.l.b16 %v269
        %v412 = vunpack.c.h.b16 %v269
        %v413 = vpack.c.b16 %v407, %v405
        %v414 = vpack.c.b16 %v408, %v406
        %v415 = vpack.c.b16 %v411, %v409
        %v416 = vpack.c.b16 %v412, %v410
        %v422 = vsel %vm354, %v281, 0
        %424 = vmatprep.subr.bf16.mxu0 %v414
        %425 = vmatpush1.bf16.msra.mxu0 %v413
        %426 = vmatprep.subr.bf16.mxu0 %v416
        %427 = vmatpush1.bf16.msra.mxu0 %v415
        %428 = vmatprep.subr.bf16.mxu0 0
        %429 = vmatpush1.bf16.msra.mxu0 0
        %430 = vmatprep.subr.bf16.mxu0 0
        %431 = vmatpush1.bf16.msra.mxu0 0
        %432 = vmatprep.subr.bf16.mxu0 0
        %433 = vmatpush1.bf16.msra.mxu0 0
        %434 = vmatprep.subr.bf16.mxu0 0
        %435 = vmatpush1.bf16.msra.mxu0 0
        %436 = vmatprep.subr.bf16.mxu0 0
        %437 = vmatpush1.bf16.msra.mxu0 0
        %438 = vmatprep.subr.bf16.mxu0 0
        %439 = vmatpush1.bf16.msra.mxu0 0
        %440 = vmatprep.subr.bf16.mxu0 0
        %441 = vmatpush1.bf16.msra.mxu0 0
        %442 = vmatprep.subr.bf16.mxu0 0
        %443 = vmatpush1.bf16.msra.mxu0 0
        %444 = vmatprep.subr.bf16.mxu0 0
        %445 = vmatpush1.bf16.msra.mxu0 0
        %446 = vmatprep.subr.bf16.mxu0 0
        %447 = vmatpush1.bf16.msra.mxu0 0
        %448 = vmatprep.subr.bf16.mxu0 0
        %449 = vmatpush1.bf16.msra.mxu0 0
        %450 = vmatprep.subr.bf16.mxu0 0
        %451 = vmatpush1.bf16.msra.mxu0 0
        %452 = vmatprep.subr.bf16.mxu0 0
        %453 = vmatpush1.bf16.msra.mxu0 0
        %454 = vmatprep.subr.bf16.mxu0 0
        %455 = vmatpush1.bf16.msra.mxu0 0
        %456 = vmatprep.mubr.bf16.mxu0 0
        %457 = vmatmul.mubr.bf16.gmra.mrb[0].mxu0 %v422
        %v458 = vpop.f32.mrb[0].mxu0
        %v459 = vadd.f32 %v393, %v458
        %v460 = vpop.f32.mrb[0].mxu0
        %v461 = vadd.f32 %v395, %v460
        %v462 = vpop.f32.mrb[0].mxu0
        %v463 = vadd.f32 %v397, %v462
        %v464 = vpop.f32.mrb[0].mxu0
        %v465 = vadd.f32 %v399, %v464
        %466 = vdwg.mxu0
        %s467 = scalar_lea.vmem [#allocation5], 8
        %v468 = vld [vmem:[%s467] sm:$0xf]
        %v469 = vld [vmem:[%s467 + $0x4] sm:$0xf]
        %v472 = vunpack.c.l.b16 %v468
        %v473 = vunpack.c.l.b16 %v469
        %v474 = vpack.c.b16 %v473, %v472
        %v476 = vsel %vm283, %v474, 0
        %478 = vmatprep.subr.bf16.mxu0 0
        %479 = vmatpush1.bf16.msra.mxu0 %v281
        %480 = vmatprep.subr.bf16.mxu0 0
        %481 = vmatpush1.bf16.msra.mxu0 0
        %482 = vmatprep.subr.bf16.mxu0 0
        %483 = vmatpush1.bf16.msra.mxu0 0
        %484 = vmatprep.subr.bf16.mxu0 0
        %485 = vmatpush1.bf16.msra.mxu0 0
        %486 = vmatprep.subr.bf16.mxu0 0
        %487 = vmatpush1.bf16.msra.mxu0 0
        %488 = vmatprep.subr.bf16.mxu0 0
        %489 = vmatpush1.bf16.msra.mxu0 0
        %490 = vmatprep.subr.bf16.mxu0 0
        %491 = vmatpush1.bf16.msra.mxu0 0
        %492 = vmatprep.subr.bf16.mxu0 0
        %493 = vmatpush1.bf16.msra.mxu0 0
        %494 = vmatprep.subr.bf16.mxu0 0
        %495 = vmatpush1.bf16.msra.mxu0 0
        %496 = vmatprep.subr.bf16.mxu0 0
        %497 = vmatpush1.bf16.msra.mxu0 0
        %498 = vmatprep.subr.bf16.mxu0 0
        %499 = vmatpush1.bf16.msra.mxu0 0
        %500 = vmatprep.subr.bf16.mxu0 0
        %501 = vmatpush1.bf16.msra.mxu0 0
        %502 = vmatprep.subr.bf16.mxu0 0
        %503 = vmatpush1.bf16.msra.mxu0 0
        %504 = vmatprep.subr.bf16.mxu0 0
        %505 = vmatpush1.bf16.msra.mxu0 0
        %506 = vmatprep.subr.bf16.mxu0 0
        %507 = vmatpush1.bf16.msra.mxu0 0
        %508 = vmatprep.subr.bf16.mxu0 0
        %509 = vmatpush1.bf16.msra.mxu0 0
        %510 = vmatprep.mubr.bf16.mxu0 0
        %511 = vmatmul.mubr.bf16.gmra.mrb[0].mxu0 %v476
        %v512 = vpop.f32.mrb[0].mxu0
        %v513 = vadd.f32 0.0, %v512
        %v514 = vpop.f32.mrb[0].mxu0
        %v515 = vpop.f32.mrb[0].mxu0
        %v516 = vadd.f32 0.0, %v515
        %v517 = vpop.f32.mrb[0].mxu0
        %518 = vdwg.mxu0
        %v519 = vpack.c.bf16 %v516, %v513
        %s520 = scalar_lea.vmem [#allocation7], 96
        %v521 = vld [vmem:[%s520] sm:$0xff]
        %v522 = vld [vmem:[%s520 + $0x8] sm:$0xff]
        %v523 = vld [vmem:[%s520 + $0x10] sm:$0xff]
        %v524 = vld [vmem:[%s520 + $0x18] sm:$0xff]
        %v529 = vunpack.c.l.b16 %v521
        %v530 = vunpack.c.h.b16 %v521
        %v531 = vunpack.c.l.b16 %v522
        %v532 = vunpack.c.h.b16 %v522
        %v533 = vunpack.c.l.b16 %v523
        %v534 = vunpack.c.h.b16 %v523
        %v535 = vunpack.c.l.b16 %v524
        %v536 = vunpack.c.h.b16 %v524
        %v537 = vpack.c.b16 %v531, %v529
        %v538 = vpack.c.b16 %v532, %v530
        %v539 = vpack.c.b16 %v535, %v533
        %v540 = vpack.c.b16 %v536, %v534
        %v546 = vsel %vm354, %v519, 0
        %548 = vmatprep.subr.bf16.mxu0 %v538
        %549 = vmatpush1.bf16.msra.mxu0 %v537
        %550 = vmatprep.subr.bf16.mxu0 %v540
        %551 = vmatpush1.bf16.msra.mxu0 %v539
        %552 = vmatprep.subr.bf16.mxu0 0
        %553 = vmatpush1.bf16.msra.mxu0 0
        %554 = vmatprep.subr.bf16.mxu0 0
        %555 = vmatpush1.bf16.msra.mxu0 0
        %556 = vmatprep.subr.bf16.mxu0 0
        %557 = vmatpush1.bf16.msra.mxu0 0
        %558 = vmatprep.subr.bf16.mxu0 0
        %559 = vmatpush1.bf16.msra.mxu0 0
        %560 = vmatprep.subr.bf16.mxu0 0
        %561 = vmatpush1.bf16.msra.mxu0 0
        %562 = vmatprep.subr.bf16.mxu0 0
        %563 = vmatpush1.bf16.msra.mxu0 0
        %564 = vmatprep.subr.bf16.mxu0 0
        %565 = vmatpush1.bf16.msra.mxu0 0
        %566 = vmatprep.subr.bf16.mxu0 0
        %567 = vmatpush1.bf16.msra.mxu0 0
        %568 = vmatprep.subr.bf16.mxu0 0
        %569 = vmatpush1.bf16.msra.mxu0 0
        %570 = vmatprep.subr.bf16.mxu0 0
        %571 = vmatpush1.bf16.msra.mxu0 0
        %572 = vmatprep.subr.bf16.mxu0 0
        %573 = vmatpush1.bf16.msra.mxu0 0
        %574 = vmatprep.subr.bf16.mxu0 0
        %575 = vmatpush1.bf16.msra.mxu0 0
        %576 = vmatprep.subr.bf16.mxu0 0
        %577 = vmatpush1.bf16.msra.mxu0 0
        %578 = vmatprep.subr.bf16.mxu0 0
        %579 = vmatpush1.bf16.msra.mxu0 0
        %580 = vmatprep.mubr.bf16.mxu0 0
        %581 = vmatmul.mubr.bf16.gmra.mrb[0].mxu0 %v546
        %v582 = vpop.f32.mrb[0].mxu0
        %v583 = vadd.f32 0.0, %v582
        %v584 = vpop.f32.mrb[0].mxu0
        %v585 = vadd.f32 0.0, %v584
        %v586 = vpop.f32.mrb[0].mxu0
        %v587 = vadd.f32 0.0, %v586
        %v588 = vpop.f32.mrb[0].mxu0
        %v589 = vadd.f32 0.0, %v588
        %590 = vdwg.mxu0
        %v591 = vadd.f32 %v459, %v583
        %v592 = vadd.f32 %v461, %v585
        %v593 = vadd.f32 %v463, %v587
        %v594 = vadd.f32 %v465, %v589
        %s595 = scalar_lea.vmem [#allocation5], 16
        %v596 = vld [vmem:[%s595] sm:$0xf]
        %v597 = vld [vmem:[%s595 + $0x4] sm:$0xf]
        %v600 = vunpack.c.l.b16 %v596
        %v601 = vunpack.c.l.b16 %v597
        %v602 = vpack.c.b16 %v601, %v600
        %v604 = vsel %vm283, %v602, 0
        %606 = vmatprep.subr.bf16.mxu0 0
        %607 = vmatpush1.bf16.msra.mxu0 %v281
        %608 = vmatprep.subr.bf16.mxu0 0
        %609 = vmatpush1.bf16.msra.mxu0 0
        %610 = vmatprep.subr.bf16.mxu0 0
        %611 = vmatpush1.bf16.msra.mxu0 0
        %612 = vmatprep.subr.bf16.mxu0 0
        %613 = vmatpush1.bf16.msra.mxu0 0
        %614 = vmatprep.subr.bf16.mxu0 0
        %615 = vmatpush1.bf16.msra.mxu0 0
        %616 = vmatprep.subr.bf16.mxu0 0
        %617 = vmatpush1.bf16.msra.mxu0 0
        %618 = vmatprep.subr.bf16.mxu0 0
        %619 = vmatpush1.bf16.msra.mxu0 0
        %620 = vmatprep.subr.bf16.mxu0 0
        %621 = vmatpush1.bf16.msra.mxu0 0
        %622 = vmatprep.subr.bf16.mxu0 0
        %623 = vmatpush1.bf16.msra.mxu0 0
        %624 = vmatprep.subr.bf16.mxu0 0
        %625 = vmatpush1.bf16.msra.mxu0 0
        %626 = vmatprep.subr.bf16.mxu0 0
        %627 = vmatpush1.bf16.msra.mxu0 0
        %628 = vmatprep.subr.bf16.mxu0 0
        %629 = vmatpush1.bf16.msra.mxu0 0
        %630 = vmatprep.subr.bf16.mxu0 0
        %631 = vmatpush1.bf16.msra.mxu0 0
        %632 = vmatprep.subr.bf16.mxu0 0
        %633 = vmatpush1.bf16.msra.mxu0 0
        %634 = vmatprep.subr.bf16.mxu0 0
        %635 = vmatpush1.bf16.msra.mxu0 0
        %636 = vmatprep.subr.bf16.mxu0 0
        %637 = vmatpush1.bf16.msra.mxu0 0
        %638 = vmatprep.mubr.bf16.mxu0 0
        %639 = vmatmul.mubr.bf16.gmra.mrb[0].mxu0 %v604
        %v640 = vpop.f32.mrb[0].mxu0
        %v641 = vadd.f32 0.0, %v640
        %v642 = vpop.f32.mrb[0].mxu0
        %v643 = vpop.f32.mrb[0].mxu0
        %v644 = vadd.f32 0.0, %v643
        %v645 = vpop.f32.mrb[0].mxu0
        %646 = vdwg.mxu0
        %v647 = vpack.c.bf16 %v644, %v641
        %s648 = scalar_lea.vmem [#allocation7], 160
        %v649 = vld [vmem:[%s648] sm:$0xff]
        %v650 = vld [vmem:[%s648 + $0x8] sm:$0xff]
        %v651 = vld [vmem:[%s648 + $0x10] sm:$0xff]
        %v652 = vld [vmem:[%s648 + $0x18] sm:$0xff]
        %v657 = vunpack.c.l.b16 %v649
        %v658 = vunpack.c.h.b16 %v649
        %v659 = vunpack.c.l.b16 %v650
        %v660 = vunpack.c.h.b16 %v650
        %v661 = vunpack.c.l.b16 %v651
        %v662 = vunpack.c.h.b16 %v651
        %v663 = vunpack.c.l.b16 %v652
        %v664 = vunpack.c.h.b16 %v652
        %v665 = vpack.c.b16 %v659, %v657
        %v666 = vpack.c.b16 %v660, %v658
        %v667 = vpack.c.b16 %v663, %v661
        %v668 = vpack.c.b16 %v664, %v662
        %v674 = vsel %vm354, %v647, 0
        %676 = vmatprep.subr.bf16.mxu0 %v666
        %677 = vmatpush1.bf16.msra.mxu0 %v665
        %678 = vmatprep.subr.bf16.mxu0 %v668
        %679 = vmatpush1.bf16.msra.mxu0 %v667
        %680 = vmatprep.subr.bf16.mxu0 0
        %681 = vmatpush1.bf16.msra.mxu0 0
        %682 = vmatprep.subr.bf16.mxu0 0
        %683 = vmatpush1.bf16.msra.mxu0 0
        %684 = vmatprep.subr.bf16.mxu0 0
        %685 = vmatpush1.bf16.msra.mxu0 0
        %686 = vmatprep.subr.bf16.mxu0 0
        %687 = vmatpush1.bf16.msra.mxu0 0
        %688 = vmatprep.subr.bf16.mxu0 0
        %689 = vmatpush1.bf16.msra.mxu0 0
        %690 = vmatprep.subr.bf16.mxu0 0
        %691 = vmatpush1.bf16.msra.mxu0 0
        %692 = vmatprep.subr.bf16.mxu0 0
        %693 = vmatpush1.bf16.msra.mxu0 0
        %694 = vmatprep.subr.bf16.mxu0 0
        %695 = vmatpush1.bf16.msra.mxu0 0
        %696 = vmatprep.subr.bf16.mxu0 0
        %697 = vmatpush1.bf16.msra.mxu0 0
        %698 = vmatprep.subr.bf16.mxu0 0
        %699 = vmatpush1.bf16.msra.mxu0 0
        %700 = vmatprep.subr.bf16.mxu0 0
        %701 = vmatpush1.bf16.msra.mxu0 0
        %702 = vmatprep.subr.bf16.mxu0 0
        %703 = vmatpush1.bf16.msra.mxu0 0
        %704 = vmatprep.subr.bf16.mxu0 0
        %705 = vmatpush1.bf16.msra.mxu0 0
        %706 = vmatprep.subr.bf16.mxu0 0
        %707 = vmatpush1.bf16.msra.mxu0 0
        %708 = vmatprep.mubr.bf16.mxu0 0
        %709 = vmatmul.mubr.bf16.gmra.mrb[0].mxu0 %v674
        %v710 = vpop.f32.mrb[0].mxu0
        %v711 = vadd.f32 0.0, %v710
        %v712 = vpop.f32.mrb[0].mxu0
        %v713 = vadd.f32 0.0, %v712
        %v714 = vpop.f32.mrb[0].mxu0
        %v715 = vadd.f32 0.0, %v714
        %v716 = vpop.f32.mrb[0].mxu0
        %v717 = vadd.f32 0.0, %v716
        %718 = vdwg.mxu0
        %v719 = vadd.f32 %v591, %v711
        %v720 = vadd.f32 %v592, %v713
        %v721 = vadd.f32 %v593, %v715
        %v722 = vadd.f32 %v594, %v717
        %723 = vmatprep.subr.bf16.mxu0 0
        %724 = vmatpush1.bf16.msra.mxu0 %v328
        %725 = vmatprep.subr.bf16.mxu0 0
        %726 = vmatpush1.bf16.msra.mxu0 0
        %727 = vmatprep.subr.bf16.mxu0 0
        %728 = vmatpush1.bf16.msra.mxu0 0
        %729 = vmatprep.subr.bf16.mxu0 0
        %730 = vmatpush1.bf16.msra.mxu0 0
        %731 = vmatprep.subr.bf16.mxu0 0
        %732 = vmatpush1.bf16.msra.mxu0 0
        %733 = vmatprep.subr.bf16.mxu0 0
        %734 = vmatpush1.bf16.msra.mxu0 0
        %735 = vmatprep.subr.bf16.mxu0 0
        %736 = vmatpush1.bf16.msra.mxu0 0
        %737 = vmatprep.subr.bf16.mxu0 0
        %738 = vmatpush1.bf16.msra.mxu0 0
        %739 = vmatprep.subr.bf16.mxu0 0
        %740 = vmatpush1.bf16.msra.mxu0 0
        %741 = vmatprep.subr.bf16.mxu0 0
        %742 = vmatpush1.bf16.msra.mxu0 0
        %743 = vmatprep.subr.bf16.mxu0 0
        %744 = vmatpush1.bf16.msra.mxu0 0
        %745 = vmatprep.subr.bf16.mxu0 0
        %746 = vmatpush1.bf16.msra.mxu0 0
        %747 = vmatprep.subr.bf16.mxu0 0
        %748 = vmatpush1.bf16.msra.mxu0 0
        %749 = vmatprep.subr.bf16.mxu0 0
        %750 = vmatpush1.bf16.msra.mxu0 0
        %751 = vmatprep.subr.bf16.mxu0 0
        %752 = vmatpush1.bf16.msra.mxu0 0
        %753 = vmatprep.subr.bf16.mxu0 0
        %754 = vmatpush1.bf16.msra.mxu0 0
        %755 = vmatprep.mubr.bf16.mxu0 0
        %756 = vmatmul.mubr.bf16.gmra.mrb[0].mxu0 %v285
        %v757 = vpop.f32.mrb[0].mxu0
        %v758 = vadd.f32 0.0, %v757
        %v759 = vpop.f32.mrb[0].mxu0
        %v760 = vpop.f32.mrb[0].mxu0
        %v761 = vadd.f32 0.0, %v760
        %v762 = vpop.f32.mrb[0].mxu0
        %763 = vdwg.mxu0
        %v764 = vpack.c.bf16 %v761, %v758
        %s765 = scalar_lea.vmem [#allocation7], 64
        %v766 = vld [vmem:[%s765] sm:$0xff]
        %v767 = vld [vmem:[%s765 + $0x8] sm:$0xff]
        %v768 = vld [vmem:[%s765 + $0x10] sm:$0xff]
        %v769 = vld [vmem:[%s765 + $0x18] sm:$0xff]
        %v774 = vunpack.c.l.b16 %v766
        %v775 = vunpack.c.h.b16 %v766
        %v776 = vunpack.c.l.b16 %v767
        %v777 = vunpack.c.h.b16 %v767
        %v778 = vunpack.c.l.b16 %v768
        %v779 = vunpack.c.h.b16 %v768
        %v780 = vunpack.c.l.b16 %v769
        %v781 = vunpack.c.h.b16 %v769
        %v782 = vpack.c.b16 %v776, %v774
        %v783 = vpack.c.b16 %v777, %v775
        %v784 = vpack.c.b16 %v780, %v778
        %v785 = vpack.c.b16 %v781, %v779
        %v791 = vsel %vm354, %v764, 0
        %793 = vmatprep.subr.bf16.mxu0 %v783
        %794 = vmatpush1.bf16.msra.mxu0 %v782
        %795 = vmatprep.subr.bf16.mxu0 %v785
        %796 = vmatpush1.bf16.msra.mxu0 %v784
        %797 = vmatprep.subr.bf16.mxu0 0
        %798 = vmatpush1.bf16.msra.mxu0 0
        %799 = vmatprep.subr.bf16.mxu0 0
        %800 = vmatpush1.bf16.msra.mxu0 0
        %801 = vmatprep.subr.bf16.mxu0 0
        %802 = vmatpush1.bf16.msra.mxu0 0
        %803 = vmatprep.subr.bf16.mxu0 0
        %804 = vmatpush1.bf16.msra.mxu0 0
        %805 = vmatprep.subr.bf16.mxu0 0
        %806 = vmatpush1.bf16.msra.mxu0 0
        %807 = vmatprep.subr.bf16.mxu0 0
        %808 = vmatpush1.bf16.msra.mxu0 0
        %809 = vmatprep.subr.bf16.mxu0 0
        %810 = vmatpush1.bf16.msra.mxu0 0
        %811 = vmatprep.subr.bf16.mxu0 0
        %812 = vmatpush1.bf16.msra.mxu0 0
        %813 = vmatprep.subr.bf16.mxu0 0
        %814 = vmatpush1.bf16.msra.mxu0 0
        %815 = vmatprep.subr.bf16.mxu0 0
        %816 = vmatpush1.bf16.msra.mxu0 0
        %817 = vmatprep.subr.bf16.mxu0 0
        %818 = vmatpush1.bf16.msra.mxu0 0
        %819 = vmatprep.subr.bf16.mxu0 0
        %820 = vmatpush1.bf16.msra.mxu0 0
        %821 = vmatprep.subr.bf16.mxu0 0
        %822 = vmatpush1.bf16.msra.mxu0 0
        %823 = vmatprep.subr.bf16.mxu0 0
        %824 = vmatpush1.bf16.msra.mxu0 0
        %825 = vmatprep.mubr.bf16.mxu0 0
        %826 = vmatmul.mubr.bf16.gmra.mrb[0].mxu0 %v791
        %v827 = vpop.f32.mrb[0].mxu0
        %v828 = vadd.f32 0.0, %v827
        %v829 = vpop.f32.mrb[0].mxu0
        %v830 = vadd.f32 0.0, %v829
        %v831 = vpop.f32.mrb[0].mxu0
        %v832 = vadd.f32 0.0, %v831
        %v833 = vpop.f32.mrb[0].mxu0
        %v834 = vadd.f32 0.0, %v833
        %835 = vdwg.mxu0
        %v836 = vadd.f32 %v719, %v828
        %v837 = vadd.f32 %v720, %v830
        %v838 = vadd.f32 %v721, %v832
        %v839 = vadd.f32 %v722, %v834
        %840 = vmatprep.subr.bf16.mxu0 0
        %841 = vmatpush1.bf16.msra.mxu0 %v519
        %842 = vmatprep.subr.bf16.mxu0 0
        %843 = vmatpush1.bf16.msra.mxu0 0
        %844 = vmatprep.subr.bf16.mxu0 0
        %845 = vmatpush1.bf16.msra.mxu0 0
        %846 = vmatprep.subr.bf16.mxu0 0
        %847 = vmatpush1.bf16.msra.mxu0 0
        %848 = vmatprep.subr.bf16.mxu0 0
        %849 = vmatpush1.bf16.msra.mxu0 0
        %850 = vmatprep.subr.bf16.mxu0 0
        %851 = vmatpush1.bf16.msra.mxu0 0
        %852 = vmatprep.subr.bf16.mxu0 0
        %853 = vmatpush1.bf16.msra.mxu0 0
        %854 = vmatprep.subr.bf16.mxu0 0
        %855 = vmatpush1.bf16.msra.mxu0 0
        %856 = vmatprep.subr.bf16.mxu0 0
        %857 = vmatpush1.bf16.msra.mxu0 0
        %858 = vmatprep.subr.bf16.mxu0 0
        %859 = vmatpush1.bf16.msra.mxu0 0
        %860 = vmatprep.subr.bf16.mxu0 0
        %861 = vmatpush1.bf16.msra.mxu0 0
        %862 = vmatprep.subr.bf16.mxu0 0
        %863 = vmatpush1.bf16.msra.mxu0 0
        %864 = vmatprep.subr.bf16.mxu0 0
        %865 = vmatpush1.bf16.msra.mxu0 0
        %866 = vmatprep.subr.bf16.mxu0 0
        %867 = vmatpush1.bf16.msra.mxu0 0
        %868 = vmatprep.subr.bf16.mxu0 0
        %869 = vmatpush1.bf16.msra.mxu0 0
        %870 = vmatprep.subr.bf16.mxu0 0
        %871 = vmatpush1.bf16.msra.mxu0 0
        %872 = vmatprep.mubr.bf16.mxu0 0
        %873 = vmatmul.mubr.bf16.gmra.mrb[0].mxu0 %v476
        %v874 = vpop.f32.mrb[0].mxu0
        %v875 = vadd.f32 0.0, %v874
        %v876 = vpop.f32.mrb[0].mxu0
        %v877 = vpop.f32.mrb[0].mxu0
        %v878 = vadd.f32 0.0, %v877
        %v879 = vpop.f32.mrb[0].mxu0
        %880 = vdwg.mxu0
        %v881 = vpack.c.bf16 %v878, %v875
        %s882 = scalar_lea.vmem [#allocation7], 128
        %v883 = vld [vmem:[%s882] sm:$0xff]
        %v884 = vld [vmem:[%s882 + $0x8] sm:$0xff]
        %v885 = vld [vmem:[%s882 + $0x10] sm:$0xff]
        %v886 = vld [vmem:[%s882 + $0x18] sm:$0xff]
        %v891 = vunpack.c.l.b16 %v883
        %v892 = vunpack.c.h.b16 %v883
        %v893 = vunpack.c.l.b16 %v884
        %v894 = vunpack.c.h.b16 %v884
        %v895 = vunpack.c.l.b16 %v885
        %v896 = vunpack.c.h.b16 %v885
        %v897 = vunpack.c.l.b16 %v886
        %v898 = vunpack.c.h.b16 %v886
        %v899 = vpack.c.b16 %v893, %v891
        %v900 = vpack.c.b16 %v894, %v892
        %v901 = vpack.c.b16 %v897, %v895
        %v902 = vpack.c.b16 %v898, %v896
        %v908 = vsel %vm354, %v881, 0
        %910 = vmatprep.subr.bf16.mxu0 %v900
        %911 = vmatpush1.bf16.msra.mxu0 %v899
        %912 = vmatprep.subr.bf16.mxu0 %v902
        %913 = vmatpush1.bf16.msra.mxu0 %v901
        %914 = vmatprep.subr.bf16.mxu0 0
        %915 = vmatpush1.bf16.msra.mxu0 0
        %916 = vmatprep.subr.bf16.mxu0 0
        %917 = vmatpush1.bf16.msra.mxu0 0
        %918 = vmatprep.subr.bf16.mxu0 0
        %919 = vmatpush1.bf16.msra.mxu0 0
        %920 = vmatprep.subr.bf16.mxu0 0
        %921 = vmatpush1.bf16.msra.mxu0 0
        %922 = vmatprep.subr.bf16.mxu0 0
        %923 = vmatpush1.bf16.msra.mxu0 0
        %924 = vmatprep.subr.bf16.mxu0 0
        %925 = vmatpush1.bf16.msra.mxu0 0
        %926 = vmatprep.subr.bf16.mxu0 0
        %927 = vmatpush1.bf16.msra.mxu0 0
        %928 = vmatprep.subr.bf16.mxu0 0
        %929 = vmatpush1.bf16.msra.mxu0 0
        %930 = vmatprep.subr.bf16.mxu0 0
        %931 = vmatpush1.bf16.msra.mxu0 0
        %932 = vmatprep.subr.bf16.mxu0 0
        %933 = vmatpush1.bf16.msra.mxu0 0
        %934 = vmatprep.subr.bf16.mxu0 0
        %935 = vmatpush1.bf16.msra.mxu0 0
        %936 = vmatprep.subr.bf16.mxu0 0
        %937 = vmatpush1.bf16.msra.mxu0 0
        %938 = vmatprep.subr.bf16.mxu0 0
        %939 = vmatpush1.bf16.msra.mxu0 0
        %940 = vmatprep.subr.bf16.mxu0 0
        %941 = vmatpush1.bf16.msra.mxu0 0
        %942 = vmatprep.mubr.bf16.mxu0 0
        %943 = vmatmul.mubr.bf16.gmra.mrb[0].mxu0 %v908
        %v944 = vpop.f32.mrb[0].mxu0
        %v945 = vadd.f32 0.0, %v944
        %v946 = vpop.f32.mrb[0].mxu0
        %v947 = vadd.f32 0.0, %v946
        %v948 = vpop.f32.mrb[0].mxu0
        %v949 = vadd.f32 0.0, %v948
        %v950 = vpop.f32.mrb[0].mxu0
        %v951 = vadd.f32 0.0, %v950
        %952 = vdwg.mxu0
        %v953 = vadd.f32 %v836, %v945
        %v954 = vadd.f32 %v837, %v947
        %v955 = vadd.f32 %v838, %v949
        %v956 = vadd.f32 %v839, %v951
        %957 = vmatprep.subr.bf16.mxu0 0
        %958 = vmatpush1.bf16.msra.mxu0 %v647
        %959 = vmatprep.subr.bf16.mxu0 0
        %960 = vmatpush1.bf16.msra.mxu0 0
        %961 = vmatprep.subr.bf16.mxu0 0
        %962 = vmatpush1.bf16.msra.mxu0 0
        %963 = vmatprep.subr.bf16.mxu0 0
        %964 = vmatpush1.bf16.msra.mxu0 0
        %965 = vmatprep.subr.bf16.mxu0 0
        %966 = vmatpush1.bf16.msra.mxu0 0
        %967 = vmatprep.subr.bf16.mxu0 0
        %968 = vmatpush1.bf16.msra.mxu0 0
        %969 = vmatprep.subr.bf16.mxu0 0
        %970 = vmatpush1.bf16.msra.mxu0 0
        %971 = vmatprep.subr.bf16.mxu0 0
        %972 = vmatpush1.bf16.msra.mxu0 0
        %973 = vmatprep.subr.bf16.mxu0 0
        %974 = vmatpush1.bf16.msra.mxu0 0
        %975 = vmatprep.subr.bf16.mxu0 0
        %976 = vmatpush1.bf16.msra.mxu0 0
        %977 = vmatprep.subr.bf16.mxu0 0
        %978 = vmatpush1.bf16.msra.mxu0 0
        %979 = vmatprep.subr.bf16.mxu0 0
        %980 = vmatpush1.bf16.msra.mxu0 0
        %981 = vmatprep.subr.bf16.mxu0 0
        %982 = vmatpush1.bf16.msra.mxu0 0
        %983 = vmatprep.subr.bf16.mxu0 0
        %984 = vmatpush1.bf16.msra.mxu0 0
        %985 = vmatprep.subr.bf16.mxu0 0
        %986 = vmatpush1.bf16.msra.mxu0 0
        %987 = vmatprep.subr.bf16.mxu0 0
        %988 = vmatpush1.bf16.msra.mxu0 0
        %989 = vmatprep.mubr.bf16.mxu0 0
        %990 = vmatmul.mubr.bf16.gmra.mrb[0].mxu0 %v604
        %v991 = vpop.f32.mrb[0].mxu0
        %v992 = vadd.f32 0.0, %v991
        %v993 = vpop.f32.mrb[0].mxu0
        %v994 = vpop.f32.mrb[0].mxu0
        %v995 = vadd.f32 0.0, %v994
        %v996 = vpop.f32.mrb[0].mxu0
        %997 = vdwg.mxu0
        %v998 = vpack.c.bf16 %v995, %v992
        %s999 = scalar_lea.vmem [#allocation7], 192
        %v1000 = vld [vmem:[%s999] sm:$0xff]
        %v1001 = vld [vmem:[%s999 + $0x8] sm:$0xff]
        %v1002 = vld [vmem:[%s999 + $0x10] sm:$0xff]
        %v1003 = vld [vmem:[%s999 + $0x18] sm:$0xff]
        %v1008 = vunpack.c.l.b16 %v1000
        %v1009 = vunpack.c.h.b16 %v1000
        %v1010 = vunpack.c.l.b16 %v1001
        %v1011 = vunpack.c.h.b16 %v1001
        %v1012 = vunpack.c.l.b16 %v1002
        %v1013 = vunpack.c.h.b16 %v1002
        %v1014 = vunpack.c.l.b16 %v1003
        %v1015 = vunpack.c.h.b16 %v1003
        %v1016 = vpack.c.b16 %v1010, %v1008
        %v1017 = vpack.c.b16 %v1011, %v1009
        %v1018 = vpack.c.b16 %v1014, %v1012
        %v1019 = vpack.c.b16 %v1015, %v1013
        %v1025 = vsel %vm354, %v998, 0
        %1027 = vmatprep.subr.bf16.mxu0 %v1017
        %1028 = vmatpush1.bf16.msra.mxu0 %v1016
        %1029 = vmatprep.subr.bf16.mxu0 %v1019
        %1030 = vmatpush1.bf16.msra.mxu0 %v1018
        %1031 = vmatprep.subr.bf16.mxu0 0
        %1032 = vmatpush1.bf16.msra.mxu0 0
        %1033 = vmatprep.subr.bf16.mxu0 0
        %1034 = vmatpush1.bf16.msra.mxu0 0
        %1035 = vmatprep.subr.bf16.mxu0 0
        %1036 = vmatpush1.bf16.msra.mxu0 0
        %1037 = vmatprep.subr.bf16.mxu0 0
        %1038 = vmatpush1.bf16.msra.mxu0 0
        %1039 = vmatprep.subr.bf16.mxu0 0
        %1040 = vmatpush1.bf16.msra.mxu0 0
        %1041 = vmatprep.subr.bf16.mxu0 0
        %1042 = vmatpush1.bf16.msra.mxu0 0
        %1043 = vmatprep.subr.bf16.mxu0 0
        %1044 = vmatpush1.bf16.msra.mxu0 0
        %1045 = vmatprep.subr.bf16.mxu0 0
        %1046 = vmatpush1.bf16.msra.mxu0 0
        %1047 = vmatprep.subr.bf16.mxu0 0
        %1048 = vmatpush1.bf16.msra.mxu0 0
        %1049 = vmatprep.subr.bf16.mxu0 0
        %1050 = vmatpush1.bf16.msra.mxu0 0
        %1051 = vmatprep.subr.bf16.mxu0 0
        %1052 = vmatpush1.bf16.msra.mxu0 0
        %1053 = vmatprep.subr.bf16.mxu0 0
        %1054 = vmatpush1.bf16.msra.mxu0 0
        %1055 = vmatprep.subr.bf16.mxu0 0
        %1056 = vmatpush1.bf16.msra.mxu0 0
        %1057 = vmatprep.subr.bf16.mxu0 0
        %1058 = vmatpush1.bf16.msra.mxu0 0
        %1059 = vmatprep.mubr.bf16.mxu0 0
        %1060 = vmatmul.mubr.bf16.gmra.mrb[0].mxu0 %v1025
        %v1061 = vpop.f32.mrb[0].mxu0
        %v1062 = vadd.f32 0.0, %v1061
        %v1063 = vpop.f32.mrb[0].mxu0
        %v1064 = vadd.f32 0.0, %v1063
        %v1065 = vpop.f32.mrb[0].mxu0
        %v1066 = vadd.f32 0.0, %v1065
        %v1067 = vpop.f32.mrb[0].mxu0
        %v1068 = vadd.f32 0.0, %v1067
        %1069 = vdwg.mxu0
        %v1070 = vadd.f32 %v953, %v1062
        %v1071 = vadd.f32 %v954, %v1064
        %v1072 = vadd.f32 %v955, %v1066
        %v1073 = vadd.f32 %v956, %v1068
        %v1074 = vld [vmem:[%s3] sm:$0x3]
        %v1076 = vlaneseq
        %v1077 = vshrl.u32 %v1076, 7
        %v1078 = vsub.s32 0, %v1077
        %v1079 = vrot.slane %v1074, %v1078
        %v1080 = vlaneseq
        %v1081 = vshrl.u32 %v1080, 7
        %v1082 = vsub.s32 1, %v1081
        %v1083 = vrot.slane %v1074, %v1082
        %v1086 = vadd.f32 %v1070, %v1079
        %v1087 = vadd.f32 %v1071, %v1083
        %v1088 = vadd.f32 %v1072, %v1079
        %v1089 = vadd.f32 %v1073, %v1083
        %1090 = vst [vmem:[%s261] sm:$0xff] %v1086
        %1091 = vst [vmem:[%s261 + $0x8] sm:$0xff] %v1087
        %1092 = vst [vmem:[%s261 + $0x10] sm:$0xff] %v1088
        %1093 = vst [vmem:[%s261 + $0x18] sm:$0xff] %v1089
        %s1094 = sand.u32 %s135, 1
        %s1095 = scalar_lea.sflag [#allocation4], %s1094
        %s1096 = sand.u32 %s135, 1
        %s1097 = smul.addr %s1096, 32
        %s1098 = scalar_lea.vmem [#allocation8], %s1097
        // Predicated region
        $region49: #{tpu_custom_call.1} parent=35 // pred_check
          %p1099 = pneg %p145
        $region50: #{tpu_custom_call.1} parent=35 // pred_check_branch
          %1101 = sbr.rel (%p1099) target = $region52
        $region51: #{tpu_custom_call.1} parent=35 // pred_region
          %s1102 = smul.u32 2, %s27
          %s1104 = ssub.s32 512, 512
          %1105 = vsyncadd %s1095, %s1104
          %s1106 = smul.addr %s26, 4
          %s1107 = sadd.s32 %s1102, %s1106
          %s1108 = smul.addr %s1107, 128
          %s1109 = scalar_lea.hbm %s4, %s1108
          %s1110 = sshll.u32 %s1098, 4
          %s1111 = int_to_ptr.vmem [resolvable:$true] %s1110
          %1116 = dma.vmem_to_hbm [thread:$0]  %s1111, 512, %s1109, %s1095, 256, 256, 16
        $region52: #{tpu_custom_call.1} parent=35 // pred_fallthru
          _
      $region36: #{tpu_custom_call.1} parent=5 // pred_fallthru
        _
      %p1117 = scmp.le.s32.totalorder 2, %s17
      // Predicated region
      $region53: #{tpu_custom_call.1} parent=5 // pred_check
        %p1118 = pneg %p1117
      $region54: #{tpu_custom_call.1} parent=5 // pred_check_branch
        %1120 = sbr.rel (%p1118) target = $region56
      $region55: #{tpu_custom_call.1} parent=5 // pred_region
        %s1121 = ssub.s32 %s17, 2
        // Predicated region
        $region57: #{tpu_custom_call.1} parent=55 // pred_check
          %p1122 = pneg %p151
        $region58: #{tpu_custom_call.1} parent=55 // pred_check_branch
          %1124 = sbr.rel (%p1122) target = $region60
        $region59: #{tpu_custom_call.1} parent=55 // pred_region
          %s1125 = sand.u32 %s136, 1
          %s1126 = scalar_lea.sflag [#allocation4], %s1125
          %s1127 = sand.u32 %s136, 1
          %s1128 = smul.addr %s1127, 32
          %s1129 = scalar_lea.vmem [#allocation8], %s1128
          %1130 = dma.done %s1126, 512
        $region60: #{tpu_custom_call.1} parent=55 // pred_fallthru
          _
      $region56: #{tpu_custom_call.1} parent=5 // pred_fallthru
        _
    $region6: #{tpu_custom_call.1} parent=1 // loop_footer
      %s21 = sadd.s32 1, %s17
    $region7: #{tpu_custom_call.1} parent=1 // loop_footer_branch
      %16 = sbr.rel target = $region3
    $region8: #{tpu_custom_call.1} parent=1 // loop_exit
      _
    %1131 = vsyncpa [#allocation3], 1
    %s1132 = scalar_lea.sflag [#allocation3], 1
    %1133 = vsyncpa %s1132, 1
    %1134 = vsyncpa [#allocation6], 1
    %1135 = vsyncpa [#allocation4], 1
    %s1136 = scalar_lea.sflag [#allocation4], 1
    %1137 = vsyncpa %s1136, 1

</llo_original>
